<compile_context>
chip_gen: v7x
topology: tpu7x:2x2x1
jax: 0.10.0
libtpu: 0.0.40
codegen_flags: <defaults>
</compile_context>

<pallas_src>
import jax
import jax.numpy as jnp
from jax.experimental import pallas as pl
from jax.experimental.pallas import tpu as pltpu


def _make_mape_kernel(inv_n: float):
    """inv_n = 1 / (B*T), baked in as a compile-time constant."""

    def mape_kernel(forecast_ref, target_ref, mask_ref, out_ref):
        # forecast_ref / target_ref / mask_ref: (B, T) f32 in VMEM
        # out_ref: (1,) f32 in SMEM
        forecast = forecast_ref[...]
        target = target_ref[...]
        mask = mask_ref[...]

        # divide_no_nan(mask, target): mask/target with NaN and +inf replaced by 0
        # (exactly the PyTorch semantics: -inf is intentionally NOT replaced).
        w = mask / target                                # VPU
        w = jnp.where(jnp.isnan(w), 0.0, w)
        w = jnp.where(w == jnp.inf, 0.0, w)

        term = jnp.abs((forecast - target) * w)          # VPU elementwise
        out_ref[0] = jnp.sum(term) * inv_n               # XLU reduce -> scalar mean

    return mape_kernel


def mape_loss(insample, freq, forecast, target, mask):
    """MAPE loss. `insample` and `freq` are accepted for interface parity but,
    as in the PyTorch module, are unused by the forward computation."""
    del insample, freq  # unused in the reference forward as well

    forecast = forecast.astype(jnp.float32)
    target = target.astype(jnp.float32)
    mask = mask.astype(jnp.float32)
    b, t = forecast.shape

    inv_n = 1.0 / float(b * t)
    out = pl.pallas_call(
        _make_mape_kernel(inv_n),
        out_shape=jax.ShapeDtypeStruct((1,), jnp.float32),
        in_specs=[
            pl.BlockSpec(memory_space=pltpu.MemorySpace.VMEM),
            pl.BlockSpec(memory_space=pltpu.MemorySpace.VMEM),
            pl.BlockSpec(memory_space=pltpu.MemorySpace.VMEM),
        ],
        out_specs=pl.BlockSpec(memory_space=pltpu.MemorySpace.SMEM),
    )(forecast, target, mask)
    return out[0]


if __name__ == "__main__":
    key = jax.random.PRNGKey(0)
    k1, k2, k3, k4 = jax.random.split(key, 4)

    batch, time = 4, 128  # lane-dense time axis (multiple of 128)

    forecast = jax.random.uniform(k1, (batch, time), jnp.float32, minval=0.0, maxval=2.0)
    target = jax.random.uniform(k2, (batch, time), jnp.float32, minval=0.5, maxval=2.0)
    # Inject zeros in the target to exercise the divide_no_nan (inf / NaN -> 0) path.
    target = target.at[:, 0].set(0.0)
    mask = jax.random.bernoulli(k3, p=0.8, shape=(batch, time)).astype(jnp.float32)

    # Unused-by-forward arguments, kept for interface parity with the nn.Module.
    insample = jax.random.uniform(k4, (batch, 16), jnp.float32)
    freq = 1

    out = mape_loss(insample, freq, forecast, target, mask)
    out = jax.block_until_ready(out)

    # Pure-JAX reference replicating the PyTorch forward exactly.
    w_ref = mask / target
    w_ref = jnp.where(jnp.isnan(w_ref), 0.0, w_ref)
    w_ref = jnp.where(w_ref == jnp.inf, 0.0, w_ref)
    ref = jnp.mean(jnp.abs((forecast - target) * w_ref))

    assert jnp.allclose(out, ref, rtol=1e-5, atol=1e-5), (out, ref)
    print("KERNEL_OK")
</pallas_src>

<mosaic_0001>
module attributes {stable_mosaic.version = 11 : i64} {
  func.func @mape_kernel(%arg0: memref<4x128xf32, #tpu.memory_space<vmem>>, %arg1: memref<4x128xf32, #tpu.memory_space<vmem>>, %arg2: memref<4x128xf32, #tpu.memory_space<vmem>>, %arg3: memref<1xf32, #tpu.memory_space<smem>>) attributes {dimension_semantics = [], scalar_prefetch = 0 : i64, scratch_operands = 0 : i64, tpu.core_type = #tpu.core_type<tc>} {
    %c0 = arith.constant 0 : index
    %c0_0 = arith.constant 0 : index
    %0 = vector.load %arg0[%c0, %c0_0] : memref<4x128xf32, #tpu.memory_space<vmem>>, vector<4x128xf32>
    %c0_1 = arith.constant 0 : index
    %c0_2 = arith.constant 0 : index
    %1 = vector.load %arg1[%c0_1, %c0_2] : memref<4x128xf32, #tpu.memory_space<vmem>>, vector<4x128xf32>
    %c0_3 = arith.constant 0 : index
    %c0_4 = arith.constant 0 : index
    %2 = vector.load %arg2[%c0_3, %c0_4] : memref<4x128xf32, #tpu.memory_space<vmem>>, vector<4x128xf32>
    %3 = arith.divf %2, %1 : vector<4x128xf32>
    %4 = arith.cmpf one, %3, %3 : vector<4x128xf32>
    %cst = arith.constant 0.000000e+00 : f32
    %5 = vector.broadcast %cst : f32 to vector<4x128xf32>
    %6 = arith.select %4, %5, %3 : vector<4x128xi1>, vector<4x128xf32>
    %cst_5 = arith.constant 0x7F800000 : f32
    %7 = vector.broadcast %cst_5 : f32 to vector<4x128xf32>
    %8 = arith.cmpf oeq, %6, %7 : vector<4x128xf32>
    %cst_6 = arith.constant 0.000000e+00 : f32
    %9 = vector.broadcast %cst_6 : f32 to vector<4x128xf32>
    %10 = arith.select %8, %9, %6 : vector<4x128xi1>, vector<4x128xf32>
    %11 = arith.subf %0, %1 : vector<4x128xf32>
    %12 = arith.mulf %11, %10 : vector<4x128xf32>
    %13 = math.absf %12 : vector<4x128xf32>
    %14 = vector.shape_cast %13 : vector<4x128xf32> to vector<1x4x128xf32>
    %cst_7 = arith.constant dense<0.000000e+00> : vector<1xf32>
    %15 = vector.multi_reduction <add>, %14, %cst_7 [1, 2] : vector<1x4x128xf32> to vector<1xf32>
    %16 = vector.shape_cast %15 : vector<1xf32> to vector<1x1x1xf32>
    %17 = vector.extract %16[0, 0, 0] : f32 from vector<1x1x1xf32>
    %cst_8 = arith.constant 0.001953125 : f32
    %18 = arith.mulf %17, %cst_8 : f32
    %c0_9 = arith.constant 0 : index
    %19 = memref.load %arg3[%c0_9] : memref<1xf32, #tpu.memory_space<smem>>
    memref.store %18, %arg3[%c0_9] : memref<1xf32, #tpu.memory_space<smem>>
    return
  }
}

</mosaic_0001>

<llo_original>
// kernel: tpu_custom_call.1
$region0: #{tpu_custom_call.1}
  #allocation0 [shape = 'u32[]', space=smem, size = 0x4, offset = 0x4, fixed_abs, tag = 'smem constant byte address 0x4 - core index']
  #allocation1 [shape = 'u32[144,128]{1,0:T(1,128)}', space=vmem, size = 0x12000, scoped, tag = 'internal scratch']
  %s0 = inlined_call_operand.hbm [shape: f32[4,128], index: 0, kind: input, shape index: {}]
  %s1 = inlined_call_operand.hbm [shape: f32[4,128], index: 1, kind: input, shape index: {}]
  %s2 = inlined_call_operand.vmem [shape: f32[4,128], index: 2, kind: input, shape index: {}]
  %s3 = inlined_call_operand.hbm [shape: f32[1], index: 3, kind: output, shape index: {}]
  %s4 = sld [smem:[#allocation0]]
  $region30: #{tpu_custom_call.1} parent=0
    _
  %s6 = ssub.s32 1, %s4
  %s7 = scalar_select 0, %s6, %s4
  $region1: #{tpu_custom_call.1} parent=0
    #allocation2 [shape = 'u8[2048]{0}', space=vmem, size = 0x800, scoped, tag = 'input window, operand 0, single buffered']
    #allocation3 [shape = 's32[1]{0}', space=sflag, size = 0x4, scoped, tag = 'scoped memory for tpu_custom_call.1']
    #allocation4 [shape = 's32[1]{0}', space=sflag, size = 0x4, scoped, tag = 'scoped memory for tpu_custom_call.1']
    #allocation5 [shape = 'u8[2048]{0}', space=vmem, size = 0x800, scoped, tag = 'input window, operand 1, single buffered']
    #allocation6 [shape = 's32[1]{0}', space=sflag, size = 0x4, scoped, tag = 'scoped memory for tpu_custom_call.1']
    #allocation7 [shape = 'u8[512]{0}', space=smem, size = 0x200, scoped, tag = 'output window, operand 0, single buffered']
    %8 = vsyncpa [#allocation3], 0
    %9 = vsyncpa [#allocation6], 0
    %10 = vsyncpa [#allocation4], 0
    // Predicated region
    $region2: #{tpu_custom_call.1} parent=1 // pred_check
      _
    $region3: #{tpu_custom_call.1} parent=1 // pred_check_branch
      %12 = sbr.rel (0) target = $region5
    $region4: #{tpu_custom_call.1} parent=1 // pred_region
      %s14 = ssub.s32 64, 64
      %15 = vsyncadd [#allocation3], %s14
      %s17 = sshll.u32 [#allocation2], 4
      %s18 = int_to_ptr.vmem [resolvable:$true] %s17
      %20 = dma.hbm_to_vmem [thread:$0]  %s0, 64, %s18, [#allocation3]
    $region5: #{tpu_custom_call.1} parent=1 // pred_fallthru
      _
    // Predicated region
    $region6: #{tpu_custom_call.1} parent=1 // pred_check
      _
    $region7: #{tpu_custom_call.1} parent=1 // pred_check_branch
      %22 = sbr.rel (0) target = $region9
    $region8: #{tpu_custom_call.1} parent=1 // pred_region
      %s24 = ssub.s32 64, 64
      %25 = vsyncadd [#allocation6], %s24
      %s27 = sshll.u32 [#allocation5], 4
      %s28 = int_to_ptr.vmem [resolvable:$true] %s27
      %30 = dma.hbm_to_vmem [thread:$0]  %s1, 64, %s28, [#allocation6]
    $region9: #{tpu_custom_call.1} parent=1 // pred_fallthru
      _
    // Predicated region
    $region10: #{tpu_custom_call.1} parent=1 // pred_check
      _
    $region11: #{tpu_custom_call.1} parent=1 // pred_check_branch
      %32 = sbr.rel (0) target = $region13
    $region12: #{tpu_custom_call.1} parent=1 // pred_region
      _
    $region13: #{tpu_custom_call.1} parent=1 // pred_fallthru
      _
    // Predicated region
    $region14: #{tpu_custom_call.1} parent=1 // pred_check
      _
    $region15: #{tpu_custom_call.1} parent=1 // pred_check_branch
      %34 = sbr.rel (0) target = $region17
    $region16: #{tpu_custom_call.1} parent=1 // pred_region
      %35 = dma.done [#allocation3], 64
    $region17: #{tpu_custom_call.1} parent=1 // pred_fallthru
      _
    // Predicated region
    $region18: #{tpu_custom_call.1} parent=1 // pred_check
      _
    $region19: #{tpu_custom_call.1} parent=1 // pred_check_branch
      %37 = sbr.rel (0) target = $region21
    $region20: #{tpu_custom_call.1} parent=1 // pred_region
      %38 = dma.done [#allocation6], 64
    $region21: #{tpu_custom_call.1} parent=1 // pred_fallthru
      _
    %v39 = vld [vmem:[#allocation2] sm:$0xf]
    %v40 = vld [vmem:[#allocation5] sm:$0xf]
    %v41 = vld [vmem:[%s2] sm:$0xf]
    %v42 = vrcp.pop %v40
    %v43 = vmul.f32 %v41, %v42
    %vm44 = vcmp.ne.f32.partialorder %v43, %v43
    %v45 = vsel %vm44, 0.0, %v43
    %vm46 = vcmp.eq.f32.partialorder %v45, inf
    %v47 = vsel %vm46, 0.0, %v45
    %v48 = vsub.f32 %v39, %v40
    %v49 = vmul.f32 %v48, %v47
    %v50 = vand.u32 2147483647, %v49
    %vm51 = vcmask 1043456
    %v52 = vsel %vm51, %v50, 0.0
    %53 = vadd.xlane.f32.xlu0 %v52
    %v54 = vpop.xlane.xlu0 %53
    %v55 = vrot.slane %v54, 4
    %v56 = vadd.f32 %v54, %v55
    %v57 = vrot.slane %v56, 2
    %v58 = vadd.f32 %v56, %v57
    %v59 = vrot.slane %v58, 1
    %v60 = vadd.f32 %v58, %v59
    %s61 = vtos %v60
    %s62 = smul.f32 %s61, 0.001953125
    %s63 = scalar_lea.smem [#allocation7], 0
    %64 = sst [smem:[%s63]] %s62
    // Predicated region
    $region22: #{tpu_custom_call.1} parent=1 // pred_check
      _
    $region23: #{tpu_custom_call.1} parent=1 // pred_check_branch
      %66 = sbr.rel (0) target = $region25
    $region24: #{tpu_custom_call.1} parent=1 // pred_region
      %s68 = ssub.s32 16, 16
      %69 = vsyncadd [#allocation4], %s68
      %72 = dma.smem_to_hbm [#allocation7], 16, %s3, [#allocation4]
    $region25: #{tpu_custom_call.1} parent=1 // pred_fallthru
      _
    // Predicated region
    $region26: #{tpu_custom_call.1} parent=1 // pred_check
      _
    $region27: #{tpu_custom_call.1} parent=1 // pred_check_branch
      %74 = sbr.rel (0) target = $region29
    $region28: #{tpu_custom_call.1} parent=1 // pred_region
      %75 = dma.done [#allocation4], 16
    $region29: #{tpu_custom_call.1} parent=1 // pred_fallthru
      _
    %76 = sfence
    %77 = vsyncpa [#allocation3], 1
    %78 = vsyncpa [#allocation6], 1
    %79 = vsyncpa [#allocation4], 1

</llo_original>
